<compile_context>
chip_gen: v7x
topology: tpu7x:2x2x1
jax: 0.10.0
libtpu: 0.0.40
codegen_flags: <defaults>
</compile_context>

<pallas_src>
import functools
import math

import jax
import jax.numpy as jnp
from jax.experimental import pallas as pl
from jax.experimental.pallas import tpu as pltpu


def _sinusoidal_kernel(time_ref, freqs_ref, out_ref, *, half_dim: int):
    # time_ref : (TB, 1)        f32 in VMEM (current batch tile)
    # freqs_ref: (1, half_dim)  f32 in VMEM (same block every grid step)
    # out_ref  : (TB, 2*half_dim) in VMEM
    args = time_ref[...] * freqs_ref[...]                      # (TB, half_dim)
    out_ref[:, :half_dim] = jnp.sin(args).astype(out_ref.dtype)
    out_ref[:, half_dim:] = jnp.cos(args).astype(out_ref.dtype)


def _choose_tile_b(B: int, dim: int) -> int:
    """Batch tile: rows multiple of 8 (or == B), ~2 MiB of output per tile."""
    target_rows = max(8, (2 * 1024 * 1024) // max(dim * 4, 1))
    if B <= target_rows:
        return B                       # whole batch fits in one comfortable tile
    return max(8, (target_rows // 8) * 8)


def _sanitize_tile_b(tb: int, B: int) -> int:
    """Clamp to B and keep it compatible with the (8, 128) block constraint."""
    tb = min(tb, B)
    if tb == B:
        return tb                      # full-extent block is always legal
    return max(8, (tb // 8) * 8)       # sub-extent blocks must be multiples of 8


def _reference(time: jax.Array, dim: int) -> jax.Array:
    half_dim = dim // 2
    emb = math.log(10000.0) / (half_dim - 1)
    freqs = jnp.exp(jnp.arange(half_dim, dtype=jnp.float32) * -emb)
    args = time[:, None].astype(jnp.float32) * freqs[None, :]
    return jnp.concatenate([jnp.sin(args), jnp.cos(args)], axis=-1)


def sinusoidal_position_embeddings(
    time: jax.Array,
    dim: int,
    *,
    out_dtype=jnp.float32,
    tile_b: int | None = None,
    use_pallas: bool | None = None,
) -> jax.Array:
    """time: (B,) -> (B, dim).  Matches the PyTorch module's forward."""
    assert dim % 2 == 0, "dim must be even"
    assert dim >= 4, "dim must be >= 4 (half_dim - 1 would be 0 for dim == 2)"
    half_dim = dim // 2
    emb_const = math.log(10000.0) / (half_dim - 1)
    B = time.shape[0]

    # Lane-narrow outputs (< 128) are overhead-bound as a standalone kernel;
    # fall back to fused XLA unless explicitly forced.
    if use_pallas is None:
        use_pallas = dim >= 128
    if not use_pallas:
        return _reference(time, dim).astype(out_dtype)

    time2d = time.astype(jnp.float32).reshape(B, 1)
    freqs = jnp.exp(
        jnp.arange(half_dim, dtype=jnp.float32) * (-emb_const)
    ).reshape(1, half_dim)

    tb = tile_b if tile_b is not None else _choose_tile_b(B, dim)
    tb = _sanitize_tile_b(tb, B)
    grid = (pl.cdiv(B, tb),)

    kernel = functools.partial(_sinusoidal_kernel, half_dim=half_dim)
    return pl.pallas_call(
        kernel,
        out_shape=jax.ShapeDtypeStruct((B, dim), out_dtype),
        grid=grid,
        in_specs=[
            pl.BlockSpec((tb, 1), lambda i: (i, 0)),            # batch tile of time
            pl.BlockSpec((1, half_dim), lambda i: (0, 0)),      # resident freqs table
        ],
        out_specs=pl.BlockSpec((tb, dim), lambda i: (i, 0)),
        compiler_params=pltpu.CompilerParams(
            dimension_semantics=("parallel",),  # shard batch tiles across TCs (v7x)
        ),
    )(time2d, freqs)


if __name__ == "__main__":
    key = jax.random.PRNGKey(0)

    # Case 1: lane-dense dim -> Pallas path (auto dispatch), single tile.
    B1, dim1 = 8, 256
    t1 = jax.random.uniform(key, (B1,), dtype=jnp.float32, minval=0.0, maxval=1000.0)
    out1 = jax.block_until_ready(sinusoidal_position_embeddings(t1, dim1))
    ref1 = _reference(t1, dim1)
    assert out1.shape == (B1, dim1)
    assert jnp.allclose(out1, ref1, atol=1e-4, rtol=1e-4), "case 1 mismatch"

    # Case 2: multiple grid tiles, including a partial last batch tile.
    B2, dim2 = 20, 128
    k2 = jax.random.fold_in(key, 1)
    t2 = jax.random.uniform(k2, (B2,), dtype=jnp.float32, minval=0.0, maxval=1000.0)
    out2 = jax.block_until_ready(
        sinusoidal_position_embeddings(t2, dim2, tile_b=8)
    )
    ref2 = _reference(t2, dim2)
    assert out2.shape == (B2, dim2)
    assert jnp.allclose(out2, ref2, atol=1e-4, rtol=1e-4), "case 2 mismatch"

    # Case 3: small dim (typical time-embedding width in the training script)
    # forced through the kernel to verify the lane-narrow store path.
    B3, dim3 = 8, 32
    k3 = jax.random.fold_in(key, 2)
    t3 = jax.random.uniform(k3, (B3,), dtype=jnp.float32, minval=0.0, maxval=1000.0)
    out3 = jax.block_until_ready(
        sinusoidal_position_embeddings(t3, dim3, use_pallas=True)
    )
    ref3 = _reference(t3, dim3)
    assert out3.shape == (B3, dim3)
    assert jnp.allclose(out3, ref3, atol=1e-4, rtol=1e-4), "case 3 mismatch"

    print("KERNEL_OK")
</pallas_src>

<mosaic_0001>
module attributes {stable_mosaic.version = 11 : i64} {
  func.func @_sinusoidal_kernel(%arg0: i32, %arg1: memref<8x1xf32, #tpu.memory_space<vmem>>, %arg2: memref<1x128xf32, #tpu.memory_space<vmem>>, %arg3: memref<8x256xf32, #tpu.memory_space<vmem>>) attributes {dimension_semantics = [#tpu.dimension_semantics<parallel>], iteration_bounds = array<i64: 1>, scalar_prefetch = 0 : i64, scratch_operands = 0 : i64, tpu.core_type = #tpu.core_type<tc>, window_params = [{transform_indices = @transform_0, window_bounds = array<i64: 8, 1>}, {pipeline_mode = #tpu.pipeline_mode<synchronous>, transform_indices = @transform_1, window_bounds = array<i64: 1, 128>}, {transform_indices = @transform_2, window_bounds = array<i64: 8, 256>}]} {
    %c0 = arith.constant 0 : index
    %c0_0 = arith.constant 0 : index
    %0 = vector.load %arg1[%c0, %c0_0] : memref<8x1xf32, #tpu.memory_space<vmem>>, vector<8x1xf32>
    %c0_1 = arith.constant 0 : index
    %c0_2 = arith.constant 0 : index
    %1 = vector.load %arg2[%c0_1, %c0_2] : memref<1x128xf32, #tpu.memory_space<vmem>>, vector<1x128xf32>
    %2 = vector.broadcast %0 : vector<8x1xf32> to vector<8x128xf32>
    %3 = vector.broadcast %1 : vector<1x128xf32> to vector<8x128xf32>
    %4 = arith.mulf %2, %3 : vector<8x128xf32>
    %5 = math.sin %4 : vector<8x128xf32>
    %c0_3 = arith.constant 0 : index
    %c0_4 = arith.constant 0 : index
    %6 = vector.load %arg3[%c0_3, %c0_4] : memref<8x256xf32, #tpu.memory_space<vmem>>, vector<8x128xf32>
    tpu.vector_store %arg3[%c0_3, %c0_4], %5 {strides = array<i32>} : memref<8x256xf32, #tpu.memory_space<vmem>>, vector<8x128xf32>,
    %7 = math.cos %4 : vector<8x128xf32>
    %c0_5 = arith.constant 0 : index
    %c128 = arith.constant 128 : index
    %8 = vector.load %arg3[%c0_5, %c128] : memref<8x256xf32, #tpu.memory_space<vmem>>, vector<8x128xf32>
    tpu.vector_store %arg3[%c0_5, %c128], %7 {strides = array<i32>} : memref<8x256xf32, #tpu.memory_space<vmem>>, vector<8x128xf32>,
    return
  }
  func.func @transform_0(%arg0: i32) -> (i32, i32) {
    %c0_i32 = arith.constant 0 : i32
    %c0_i32_0 = arith.constant 0 : i32
    return %arg0, %c0_i32 : i32, i32
  }
  func.func @transform_1(%arg0: i32) -> (i32, i32) {
    %c0_i32 = arith.constant 0 : i32
    %c0_i32_0 = arith.constant 0 : i32
    %c0_i32_1 = arith.constant 0 : i32
    return %c0_i32, %c0_i32_0 : i32, i32
  }
  func.func @transform_2(%arg0: i32) -> (i32, i32) {
    %c0_i32 = arith.constant 0 : i32
    %c0_i32_0 = arith.constant 0 : i32
    return %arg0, %c0_i32 : i32, i32
  }
}

</mosaic_0001>

<llo_original>
// kernel: tpu_custom_call.1
$region0: #{tpu_custom_call.1}
  #allocation0 [shape = 'u32[]', space=smem, size = 0x4, offset = 0x4, fixed_abs, tag = 'smem constant byte address 0x4 - core index']
  #allocation1 [shape = 'u32[144,128]{1,0:T(1,128)}', space=vmem, size = 0x12000, scoped, tag = 'internal scratch']
  %s0 = inlined_call_operand.vmem [shape: f32[8,1], index: 0, kind: input, shape index: {}]
  %s1 = inlined_call_operand.vmem [shape: f32[1,128], index: 1, kind: input, shape index: {}]
  %s2 = inlined_call_operand.hbm [shape: f32[8,256], index: 2, kind: output, shape index: {}]
  %s3 = sld [smem:[#allocation0]]
  $region18: #{tpu_custom_call.1} parent=0
    _
  %s5 = ssub.s32 1, %s3
  %s6 = scalar_select 0, %s5, %s3
  $region1: #{tpu_custom_call.1} parent=0
    #allocation2 [shape = 'u8[8192]{0}', space=vmem, size = 0x2000, scoped, tag = 'output window, operand 0, single buffered']
    #allocation3 [shape = 's32[1]{0}', space=sflag, size = 0x4, scoped, tag = 'scoped memory for tpu_custom_call.1']
    %7 = vsyncpa [#allocation3], 0
    // Predicated region
    $region2: #{tpu_custom_call.1} parent=1 // pred_check
      _
    $region3: #{tpu_custom_call.1} parent=1 // pred_check_branch
      %9 = sbr.rel (0) target = $region5
    $region4: #{tpu_custom_call.1} parent=1 // pred_region
      _
    $region5: #{tpu_custom_call.1} parent=1 // pred_fallthru
      _
    // Predicated region
    $region6: #{tpu_custom_call.1} parent=1 // pred_check
      _
    $region7: #{tpu_custom_call.1} parent=1 // pred_check_branch
      %11 = sbr.rel (0) target = $region9
    $region8: #{tpu_custom_call.1} parent=1 // pred_region
      _
    $region9: #{tpu_custom_call.1} parent=1 // pred_fallthru
      _
    %v12 = vld [vmem:[%s0] sm:$0xff]
    %v13 = vld [vmem:[%s1] sm:$0x1]
    %15 = vset.pattern.permute.xlu0 0
    %16 = vperm.xlu0 %15, %v12
    %v17 = vpop.permute.xlu0 %16
    %v20 = vlaneseq
    %v21 = vshrl.u32 %v20, 7
    %v22 = vsub.s32 0, %v21
    %v23 = vrot.slane %v13, %v22
    %v25 = vmul.f32 %v17, %v23
    %v26 = vand.u32 2147483647, %v25
    %vm27 = vcmp.le.f32.partialorder %v26, 0.7853982
    %vm28 = vcmp.lt.s32.totalorder %v25, 0
    %v29 = vand.u32 %v25, 2139095040
    %v30 = vshrl.u32 %v29, 23
    %v31 = vsub.s32 %v30, 127
    %v32 = vand.u32 2147483647, %v25
    %v33 = vand.u32 %v32, 8388607
    %v34 = vor.u32 %v33, 8388608
    %v35 = vsub.s32 0, %v34
    %v36 = vadd.s32 %v31, 1
    %vm37 = vcmp.gt.s32.totalorder %v36, 0
    %v38 = vsel %vm37, %v36, 0
    %v39 = vshrl.u32 %v38, 5
    %v40 = vand.u32 %v38, 31
    %v41 = vsub.s32 32, %v40
    %v42 = vshrl.u32 683565275, %v41
    %v43 = vshll.u32 683565275, %v40
    %v44 = vshrl.u32 2475754826, %v41
    %v45 = vor.u32 %v43, %v44
    %v46 = vshll.u32 2475754826, %v40
    %v47 = vshrl.u32 2131351028, %v41
    %v48 = vor.u32 %v46, %v47
    %v49 = vshll.u32 2131351028, %v40
    %v50 = vshrl.u32 2102212464, %v41
    %v51 = vor.u32 %v49, %v50
    %v52 = vshll.u32 2102212464, %v40
    %v53 = vshrl.u32 920167782, %v41
    %v54 = vor.u32 %v52, %v53
    %v55 = vshll.u32 920167782, %v40
    %v56 = vshrl.u32 1326507024, %v41
    %v57 = vor.u32 %v55, %v56
    %vm58 = vcmp.lt.s32.totalorder %v39, 1
    %vm59 = vcmp.lt.s32.totalorder %v39, 2
    %vm60 = vcmp.lt.s32.totalorder %v39, 3
    %vm61 = vcmp.lt.s32.totalorder %v39, 4
    %v62 = vsel %vm58, %v42, %v45
    %v63 = vsel %vm61, %v51, 2102212464
    %v64 = vsel %vm60, %v48, %v63
    %v65 = vsel %vm59, %v62, %v64
    %v66 = vsel %vm58, %v45, %v48
    %v67 = vsel %vm61, %v54, 920167782
    %v68 = vsel %vm60, %v51, %v67
    %v69 = vsel %vm59, %v66, %v68
    %v70 = vsel %vm58, %v48, %v51
    %v71 = vsel %vm61, %v57, 1326507024
    %v72 = vsel %vm60, %v54, %v71
    %v73 = vsel %vm59, %v70, %v72
    %v74 = vshll.u32 %v34, 8
    %v75 = vmul.u32.u64.compose %v74, %v73
    %v76 = vextract.low.u32 %v75
    %v77 = vextract.high.u32 %v75
    %v78 = vmul.u32.u64.compose %v74, %v69
    %v79 = vextract.low.u32 %v78
    %v80 = vextract.high.u32 %v78
    %v81 = vmul.u32 %v74, %v65
    %v82 = vadd.s32 %v77, %v79
    %vm83 = vc.u32 %v77, %v79
    %v84 = vadd.s32 %v80, 1
    %v85 = vsel %vm83, %v84, %v80
    %v86 = vadd.s32 %v81, %v85
    %v87 = vadd.s32 %v86, 536870912
    %v88 = vshrl.u32 %v87, 30
    %v89 = vshll.u32 %v88, 30
    %v90 = vsub.s32 %v86, %v89
    %vm91 = vcmp.lt.s32.totalorder %v90, 0
    %v92 = vsub.s32 0, %v90
    %v93 = vsel %vm91, %v92, %v90
    %v94 = vclz %v93
    %v95 = vsub.s32 %v94, 2
    %vm96 = vcmp.gt.s32.totalorder 0, %v95
    %v97 = vsel %vm96, 0, %v95
    %v98 = vsub.s32 32, %v97
    %v99 = vshll.u32 %v90, %v97
    %v100 = vshrl.u32 %v82, %v98
    %v101 = vor.u32 %v99, %v100
    %v102 = vsub.s32 4294967266, %v97
    %v103 = vadd.s32 %v102, 127
    %v104 = vshll.u32 %v103, 23
    %v105 = vor.u32 4788187, %v104
    %v106 = vand.u32 2147483647, %v105
    %v108 = vcvt.s32.f32 %v101
    %v109 = vmul.f32 %v108, %v106
    %v110 = vxor.u32 %v109, 2147483648
    %v111 = vsel %vm28, %v110, %v109
    %v112 = vsub.s32 4, %v88
    %v113 = vsel %vm28, %v112, %v88
    %v114 = vsel %vm27, %v25, %v111
    %v115 = vsel %vm27, 0, %v113
    %v116 = vcosq.f32.pop %v114
    %v117 = vsinq.f32.pop %v114
    %vm118 = vweird.f32 %v25
    %v119 = vadd.s32 %v115, 3
    %v120 = vand.u32 %v119, 3
    %vm121 = vcmp.lt.s32.totalorder %v120, 2
    %vm122 = vcmp.eq.s32.totalorder %v120, 0
    %v123 = vxor.u32 %v117, 2147483648
    %v124 = vsel %vm122, %v116, %v123
    %vm125 = vcmp.eq.s32.totalorder %v120, 2
    %v126 = vxor.u32 %v116, 2147483648
    %v127 = vsel %vm125, %v126, %v117
    %v128 = vsel %vm121, %v124, %v127
    %v129 = vsel %vm118, nan, %v128
    %130 = vst [vmem:[#allocation2] sm:$0xff] %v129
    %v131 = vand.u32 2147483647, %v25
    %vm132 = vcmp.le.f32.partialorder %v131, 0.7853982
    %vm133 = vcmp.lt.s32.totalorder %v25, 0
    %v134 = vand.u32 %v25, 2139095040
    %v135 = vshrl.u32 %v134, 23
    %v136 = vsub.s32 %v135, 127
    %v137 = vand.u32 2147483647, %v25
    %v138 = vand.u32 %v137, 8388607
    %v139 = vor.u32 %v138, 8388608
    %v140 = vsub.s32 0, %v139
    %v141 = vadd.s32 %v136, 1
    %vm142 = vcmp.gt.s32.totalorder %v141, 0
    %v143 = vsel %vm142, %v141, 0
    %v144 = vshrl.u32 %v143, 5
    %v145 = vand.u32 %v143, 31
    %v146 = vsub.s32 32, %v145
    %v147 = vshrl.u32 683565275, %v146
    %v148 = vshll.u32 683565275, %v145
    %v149 = vshrl.u32 2475754826, %v146
    %v150 = vor.u32 %v148, %v149
    %v151 = vshll.u32 2475754826, %v145
    %v152 = vshrl.u32 2131351028, %v146
    %v153 = vor.u32 %v151, %v152
    %v154 = vshll.u32 2131351028, %v145
    %v155 = vshrl.u32 2102212464, %v146
    %v156 = vor.u32 %v154, %v155
    %v157 = vshll.u32 2102212464, %v145
    %v158 = vshrl.u32 920167782, %v146
    %v159 = vor.u32 %v157, %v158
    %v160 = vshll.u32 920167782, %v145
    %v161 = vshrl.u32 1326507024, %v146
    %v162 = vor.u32 %v160, %v161
    %vm163 = vcmp.lt.s32.totalorder %v144, 1
    %vm164 = vcmp.lt.s32.totalorder %v144, 2
    %vm165 = vcmp.lt.s32.totalorder %v144, 3
    %vm166 = vcmp.lt.s32.totalorder %v144, 4
    %v167 = vsel %vm163, %v147, %v150
    %v168 = vsel %vm166, %v156, 2102212464
    %v169 = vsel %vm165, %v153, %v168
    %v170 = vsel %vm164, %v167, %v169
    %v171 = vsel %vm163, %v150, %v153
    %v172 = vsel %vm166, %v159, 920167782
    %v173 = vsel %vm165, %v156, %v172
    %v174 = vsel %vm164, %v171, %v173
    %v175 = vsel %vm163, %v153, %v156
    %v176 = vsel %vm166, %v162, 1326507024
    %v177 = vsel %vm165, %v159, %v176
    %v178 = vsel %vm164, %v175, %v177
    %v179 = vshll.u32 %v139, 8
    %v180 = vmul.u32.u64.compose %v179, %v178
    %v181 = vextract.low.u32 %v180
    %v182 = vextract.high.u32 %v180
    %v183 = vmul.u32.u64.compose %v179, %v174
    %v184 = vextract.low.u32 %v183
    %v185 = vextract.high.u32 %v183
    %v186 = vmul.u32 %v179, %v170
    %v187 = vadd.s32 %v182, %v184
    %vm188 = vc.u32 %v182, %v184
    %v189 = vadd.s32 %v185, 1
    %v190 = vsel %vm188, %v189, %v185
    %v191 = vadd.s32 %v186, %v190
    %v192 = vadd.s32 %v191, 536870912
    %v193 = vshrl.u32 %v192, 30
    %v194 = vshll.u32 %v193, 30
    %v195 = vsub.s32 %v191, %v194
    %vm196 = vcmp.lt.s32.totalorder %v195, 0
    %v197 = vsub.s32 0, %v195
    %v198 = vsel %vm196, %v197, %v195
    %v199 = vclz %v198
    %v200 = vsub.s32 %v199, 2
    %vm201 = vcmp.gt.s32.totalorder 0, %v200
    %v202 = vsel %vm201, 0, %v200
    %v203 = vsub.s32 32, %v202
    %v204 = vshll.u32 %v195, %v202
    %v205 = vshrl.u32 %v187, %v203
    %v206 = vor.u32 %v204, %v205
    %v207 = vsub.s32 4294967266, %v202
    %v208 = vadd.s32 %v207, 127
    %v209 = vshll.u32 %v208, 23
    %v210 = vor.u32 4788187, %v209
    %v211 = vand.u32 2147483647, %v210
    %v213 = vcvt.s32.f32 %v206
    %v214 = vmul.f32 %v213, %v211
    %v215 = vxor.u32 %v214, 2147483648
    %v216 = vsel %vm133, %v215, %v214
    %v217 = vsub.s32 4, %v193
    %v218 = vsel %vm133, %v217, %v193
    %v219 = vsel %vm132, %v25, %v216
    %v220 = vsel %vm132, 0, %v218
    %v221 = vcosq.f32.pop %v219
    %v222 = vsinq.f32.pop %v219
    %vm223 = vweird.f32 %v25
    %v224 = vand.u32 %v220, 3
    %vm225 = vcmp.lt.s32.totalorder %v224, 2
    %vm226 = vcmp.eq.s32.totalorder %v224, 0
    %v227 = vxor.u32 %v222, 2147483648
    %v228 = vsel %vm226, %v221, %v227
    %vm229 = vcmp.eq.s32.totalorder %v224, 2
    %v230 = vxor.u32 %v221, 2147483648
    %v231 = vsel %vm229, %v230, %v222
    %v232 = vsel %vm225, %v228, %v231
    %v233 = vsel %vm223, nan, %v232
    %234 = vst [vmem:[#allocation2 + $0x8] sm:$0xff] %v233
    // Predicated region
    $region10: #{tpu_custom_call.1} parent=1 // pred_check
      _
    $region11: #{tpu_custom_call.1} parent=1 // pred_check_branch
      %236 = sbr.rel (0) target = $region13
    $region12: #{tpu_custom_call.1} parent=1 // pred_region
      %s238 = ssub.s32 256, 256
      %239 = vsyncadd [#allocation3], %s238
      %s241 = sshll.u32 [#allocation2], 4
      %s242 = int_to_ptr.vmem [resolvable:$true] %s241
      %244 = dma.vmem_to_hbm [thread:$0]  %s242, 256, %s2, [#allocation3]
    $region13: #{tpu_custom_call.1} parent=1 // pred_fallthru
      _
    // Predicated region
    $region14: #{tpu_custom_call.1} parent=1 // pred_check
      _
    $region15: #{tpu_custom_call.1} parent=1 // pred_check_branch
      %246 = sbr.rel (0) target = $region17
    $region16: #{tpu_custom_call.1} parent=1 // pred_region
      %247 = dma.done [#allocation3], 256
    $region17: #{tpu_custom_call.1} parent=1 // pred_fallthru
      _
    %248 = vsyncpa [#allocation3], 1

</llo_original>
